<compile_context>
chip_gen: v5e
topology: v5e:2x2
jax: 0.10.0
libtpu: 0.0.40
codegen_flags: <defaults>
</compile_context>

<pallas_src>
import math
import jax
import jax.numpy as jnp
from jax.experimental import pallas as pl
from jax.experimental.pallas import tpu as pltpu


def _round_up(x: int, m: int) -> int:
    return ((x + m - 1) // m) * m


def decoder_kernel(x_ref, w1_ref, b1_ref, w2_ref, b2_ref, o_ref):
    """Fused MLP decoder on one batch tile: matmul -> relu -> matmul -> sigmoid."""
    x = x_ref[...]                                                   # (TB, L)
    # Linear 1 (f32 accumulation on the MXU) + bias + ReLU in f32.
    h = jnp.dot(x, w1_ref[...], preferred_element_type=jnp.float32)
    h = jnp.maximum(h + b1_ref[...], jnp.float32(0.0))               # (TB, H) f32
    # Linear 2: cast activations to the weight dtype (bf16 fast path) for the
    # MXU, accumulate in f32, then bias + sigmoid in f32.
    y = jnp.dot(h.astype(w2_ref.dtype), w2_ref[...],
                preferred_element_type=jnp.float32)
    y = y + b2_ref[...]                                              # (TB, O) f32
    # sigmoid(y) == 0.5 * (tanh(y/2) + 1): single EUP op + cheap VPU ops.
    o_ref[...] = (0.5 * jnp.tanh(0.5 * y) + 0.5).astype(o_ref.dtype)


def decoder_forward(x, w1, b1, w2, b2, *, block_batch=1024, matmul_dtype=None):
    """Decoder forward pass.

    x : (B, latent)         w1: (latent, hidden)   b1: (hidden,) or (1, hidden)
                            w2: (hidden, out)      b2: (out,)    or (1, out)
    Weights are stored (in, out) so row-major x @ W equals the PyTorch
    module's x @ W^T.
    """
    B, L = x.shape
    H = w1.shape[1]
    O = w2.shape[1]

    # Biases as (1, dim) rows, kept in f32 (elementwise math stays f32).
    if b1.ndim == 1:
        b1 = b1.reshape(1, H)
    if b2.ndim == 1:
        b2 = b2.reshape(1, O)
    b1 = b1.astype(jnp.float32)
    b2 = b2.astype(jnp.float32)

    # Optional low-precision matmul operands (halves HBM traffic / MXU push
    # bandwidth on v6e/v7x); accumulation stays f32 inside the kernel.
    if matmul_dtype is not None:
        x = x.astype(matmul_dtype)
        w1 = w1.astype(matmul_dtype)
        w2 = w2.astype(matmul_dtype)

    # Batch tile: multiple of the 8-row sublane granule, at most block_batch.
    TB = _round_up(min(block_batch, B), 8)
    # v7x megacore: if one tile would cover a realistically sized batch, split
    # it so the "parallel" grid axis has >= 2 steps for both TensorCores.
    if TB >= B and B >= 128:
        TB = _round_up((B + 1) // 2, 8)

    grid = (pl.cdiv(B, TB),)

    out = pl.pallas_call(
        decoder_kernel,
        out_shape=jax.ShapeDtypeStruct((B, O), jnp.float32),
        grid_spec=pl.GridSpec(
            grid=grid,
            in_specs=[
                # x: one batch tile per grid step; full (unpadded) latent dim.
                pl.BlockSpec((TB, L), lambda i: (i, 0)),
                # Weights / biases: constant block index -> DMA'd once,
                # VMEM-resident across the whole batch loop.
                pl.BlockSpec((L, H), lambda i: (0, 0)),
                pl.BlockSpec((1, H), lambda i: (0, 0)),
                pl.BlockSpec((H, O), lambda i: (0, 0)),
                pl.BlockSpec((1, O), lambda i: (0, 0)),
            ],
            out_specs=pl.BlockSpec((TB, O), lambda i: (i, 0)),
        ),
        compiler_params=pltpu.CompilerParams(
            # Batch tiles are independent -> shard across TensorCores (v7x).
            dimension_semantics=("parallel",),
        ),
    )(x, w1, b1, w2, b2)

    return out


def init_linear_params(key, in_dim, out_dim, dtype=jnp.float32):
    """Deterministic init mimicking nn.Linear's U(-1/sqrt(in), 1/sqrt(in))."""
    kw, kb = jax.random.split(key)
    bound = 1.0 / math.sqrt(in_dim)
    # PyTorch stores weight as (out, in); we keep (in, out) so the kernel's
    # row-major matmul is exactly x @ W^T of the PyTorch module.
    w = jax.random.uniform(kw, (in_dim, out_dim), dtype, minval=-bound, maxval=bound)
    b = jax.random.uniform(kb, (out_dim,), dtype, minval=-bound, maxval=bound)
    return w, b


def _reference(x, w1, b1, w2, b2):
    return jax.nn.sigmoid(jnp.maximum(x @ w1 + b1, 0.0) @ w2 + b2)


if __name__ == "__main__":
    # Small shapes consistent with the module's forward:
    #   latent_dim=16, hidden_dim=32, output_dim=64, batch=8
    batch, latent_dim, hidden_dim, output_dim = 8, 16, 32, 64

    key = jax.random.PRNGKey(0)
    kx, k1, k2 = jax.random.split(key, 3)

    x = jax.random.normal(kx, (batch, latent_dim), jnp.float32)
    w1, b1 = init_linear_params(k1, latent_dim, hidden_dim)
    w2, b2 = init_linear_params(k2, hidden_dim, output_dim)

    out = decoder_forward(x, w1, b1, w2, b2)
    out = jax.block_until_ready(out)

    ref = _reference(x, w1, b1, w2, b2)
    assert out.shape == (batch, output_dim)
    assert jnp.allclose(out, ref, atol=1e-5, rtol=1e-5), "mismatch vs reference"

    # Second check: non-multiple batch exercising batch tiling (grid > 1) and
    # the unpadded, partially-OOB last batch block (masked output writeback).
    batch2 = 200
    x2 = jax.random.normal(jax.random.PRNGKey(1), (batch2, latent_dim), jnp.float32)
    out2 = jax.block_until_ready(decoder_forward(x2, w1, b1, w2, b2, block_batch=64))
    ref2 = _reference(x2, w1, b1, w2, b2)
    assert out2.shape == (batch2, output_dim)
    assert jnp.allclose(out2, ref2, atol=1e-5, rtol=1e-5), "mismatch vs reference (tiled batch)"

    # Third check: bf16 matmul operands (deployment fast path), f32 elementwise
    # math and f32 accumulation inside the kernel; loose tolerance.
    out3 = jax.block_until_ready(
        decoder_forward(x2, w1, b1, w2, b2, matmul_dtype=jnp.bfloat16))
    assert out3.shape == (batch2, output_dim)
    assert jnp.allclose(out3, ref2, atol=3e-2, rtol=3e-2), "mismatch vs reference (bf16)"

    print("KERNEL_OK")
</pallas_src>

<mosaic_0001>
module attributes {stable_mosaic.version = 11 : i64} {
  func.func @decoder_kernel(%arg0: i32, %arg1: memref<8x16xf32, #tpu.memory_space<vmem>>, %arg2: memref<16x32xf32, #tpu.memory_space<vmem>>, %arg3: memref<1x32xf32, #tpu.memory_space<vmem>>, %arg4: memref<32x64xf32, #tpu.memory_space<vmem>>, %arg5: memref<1x64xf32, #tpu.memory_space<vmem>>, %arg6: memref<8x64xf32, #tpu.memory_space<vmem>>) attributes {dimension_semantics = [#tpu.dimension_semantics<parallel>], iteration_bounds = array<i64: 1>, scalar_prefetch = 0 : i64, scratch_operands = 0 : i64, tpu.core_type = #tpu.core_type<tc>, window_params = [{transform_indices = @transform_0, window_bounds = array<i64: 8, 16>}, {pipeline_mode = #tpu.pipeline_mode<synchronous>, transform_indices = @transform_1, window_bounds = array<i64: 16, 32>}, {pipeline_mode = #tpu.pipeline_mode<synchronous>, transform_indices = @transform_2, window_bounds = array<i64: 1, 32>}, {pipeline_mode = #tpu.pipeline_mode<synchronous>, transform_indices = @transform_3, window_bounds = array<i64: 32, 64>}, {pipeline_mode = #tpu.pipeline_mode<synchronous>, transform_indices = @transform_4, window_bounds = array<i64: 1, 64>}, {transform_indices = @transform_5, window_bounds = array<i64: 8, 64>}]} {
    %c0 = arith.constant 0 : index
    %c0_0 = arith.constant 0 : index
    %0 = vector.load %arg1[%c0, %c0_0] : memref<8x16xf32, #tpu.memory_space<vmem>>, vector<8x16xf32>
    %c0_1 = arith.constant 0 : index
    %c0_2 = arith.constant 0 : index
    %1 = vector.load %arg2[%c0_1, %c0_2] : memref<16x32xf32, #tpu.memory_space<vmem>>, vector<16x32xf32>
    %cst = arith.constant dense<0.000000e+00> : vector<8x32xf32>
    %2 = tpu.matmul %0, %1, %cst {dimension_numbers = #tpu.dot_dimension_numbers<[1], [0], [0], [1], [0, 0, 1, 1], [], []>} : vector<8x16xf32>, vector<16x32xf32>, vector<8x32xf32> -> vector<8x32xf32>
    %c0_3 = arith.constant 0 : index
    %c0_4 = arith.constant 0 : index
    %3 = vector.load %arg3[%c0_3, %c0_4] : memref<1x32xf32, #tpu.memory_space<vmem>>, vector<1x32xf32>
    %4 = vector.broadcast %3 : vector<1x32xf32> to vector<8x32xf32>
    %5 = arith.addf %2, %4 : vector<8x32xf32>
    %cst_5 = arith.constant 0.000000e+00 : f32
    %6 = vector.broadcast %cst_5 : f32 to vector<8x32xf32>
    %7 = arith.maximumf %5, %6 : vector<8x32xf32>
    %c0_6 = arith.constant 0 : index
    %c0_7 = arith.constant 0 : index
    %8 = vector.load %arg4[%c0_6, %c0_7] : memref<32x64xf32, #tpu.memory_space<vmem>>, vector<32x64xf32>
    %cst_8 = arith.constant dense<0.000000e+00> : vector<8x64xf32>
    %9 = tpu.matmul %7, %8, %cst_8 {dimension_numbers = #tpu.dot_dimension_numbers<[1], [0], [0], [1], [0, 0, 1, 1], [], []>} : vector<8x32xf32>, vector<32x64xf32>, vector<8x64xf32> -> vector<8x64xf32>
    %c0_9 = arith.constant 0 : index
    %c0_10 = arith.constant 0 : index
    %10 = vector.load %arg5[%c0_9, %c0_10] : memref<1x64xf32, #tpu.memory_space<vmem>>, vector<1x64xf32>
    %11 = vector.broadcast %10 : vector<1x64xf32> to vector<8x64xf32>
    %12 = arith.addf %9, %11 : vector<8x64xf32>
    %cst_11 = arith.constant 5.000000e-01 : f32
    %13 = vector.broadcast %cst_11 : f32 to vector<8x64xf32>
    %14 = arith.mulf %13, %12 : vector<8x64xf32>
    %15 = math.tanh %14 : vector<8x64xf32>
    %cst_12 = arith.constant 5.000000e-01 : f32
    %16 = vector.broadcast %cst_12 : f32 to vector<8x64xf32>
    %17 = arith.mulf %16, %15 : vector<8x64xf32>
    %cst_13 = arith.constant 5.000000e-01 : f32
    %18 = vector.broadcast %cst_13 : f32 to vector<8x64xf32>
    %19 = arith.addf %17, %18 : vector<8x64xf32>
    %c0_14 = arith.constant 0 : index
    %c0_15 = arith.constant 0 : index
    %20 = vector.load %arg6[%c0_14, %c0_15] : memref<8x64xf32, #tpu.memory_space<vmem>>, vector<8x64xf32>
    tpu.vector_store %arg6[%c0_14, %c0_15], %19 {strides = array<i32>} : memref<8x64xf32, #tpu.memory_space<vmem>>, vector<8x64xf32>,
    return
  }
  func.func @transform_0(%arg0: i32) -> (i32, i32) {
    %c0_i32 = arith.constant 0 : i32
    %c0_i32_0 = arith.constant 0 : i32
    return %arg0, %c0_i32 : i32, i32
  }
  func.func @transform_1(%arg0: i32) -> (i32, i32) {
    %c0_i32 = arith.constant 0 : i32
    %c0_i32_0 = arith.constant 0 : i32
    %c0_i32_1 = arith.constant 0 : i32
    return %c0_i32, %c0_i32_0 : i32, i32
  }
  func.func @transform_2(%arg0: i32) -> (i32, i32) {
    %c0_i32 = arith.constant 0 : i32
    %c0_i32_0 = arith.constant 0 : i32
    %c0_i32_1 = arith.constant 0 : i32
    return %c0_i32, %c0_i32_0 : i32, i32
  }
  func.func @transform_3(%arg0: i32) -> (i32, i32) {
    %c0_i32 = arith.constant 0 : i32
    %c0_i32_0 = arith.constant 0 : i32
    %c0_i32_1 = arith.constant 0 : i32
    return %c0_i32, %c0_i32_0 : i32, i32
  }
  func.func @transform_4(%arg0: i32) -> (i32, i32) {
    %c0_i32 = arith.constant 0 : i32
    %c0_i32_0 = arith.constant 0 : i32
    %c0_i32_1 = arith.constant 0 : i32
    return %c0_i32, %c0_i32_0 : i32, i32
  }
  func.func @transform_5(%arg0: i32) -> (i32, i32) {
    %c0_i32 = arith.constant 0 : i32
    %c0_i32_0 = arith.constant 0 : i32
    return %arg0, %c0_i32 : i32, i32
  }
}

</mosaic_0001>

<llo_original>
// kernel: tpu_custom_call.1
$region0: #{tpu_custom_call.1}
  #allocation0 [shape = 'u32[]', space=smem, size = 0x4, offset = 0x4, fixed_abs, tag = 'smem constant byte address 0x4 - core index']
  #allocation1 [shape = 'u32[72,128]{1,0:T(1,128)}', space=vmem, size = 0x9000, scoped, tag = 'internal scratch']
  %s0 = inlined_call_operand.hbm [shape: f32[8,16], index: 0, kind: input, shape index: {}]
  %s1 = inlined_call_operand.hbm [shape: f32[16,32], index: 1, kind: input, shape index: {}]
  %s2 = inlined_call_operand.vmem [shape: f32[1,32], index: 2, kind: input, shape index: {}]
  %s3 = inlined_call_operand.hbm [shape: f32[32,64], index: 3, kind: input, shape index: {}]
  %s4 = inlined_call_operand.vmem [shape: f32[1,64], index: 4, kind: input, shape index: {}]
  %s5 = inlined_call_operand.hbm [shape: f32[8,64], index: 5, kind: output, shape index: {}]
  %s6 = sld [smem:[#allocation0]]
  $region42: #{tpu_custom_call.1} parent=0
    _
  %s8 = ssub.s32 1, %s6
  %s9 = scalar_select 0, %s8, %s6
  $region1: #{tpu_custom_call.1} parent=0
    #allocation2 [shape = 'u8[4096]{0}', space=vmem, size = 0x1000, scoped, tag = 'input window, operand 0, single buffered']
    #allocation3 [shape = 's32[1]{0}', space=sflag, size = 0x4, scoped, tag = 'scoped memory for tpu_custom_call.1']
    #allocation4 [shape = 's32[1]{0}', space=sflag, size = 0x4, scoped, tag = 'scoped memory for tpu_custom_call.1']
    #allocation5 [shape = 'u8[8192]{0}', space=vmem, size = 0x2000, scoped, tag = 'input window, operand 1, single buffered']
    #allocation6 [shape = 's32[1]{0}', space=sflag, size = 0x4, scoped, tag = 'scoped memory for tpu_custom_call.1']
    #allocation7 [shape = 'u8[16384]{0}', space=vmem, size = 0x4000, scoped, tag = 'input window, operand 3, single buffered']
    #allocation8 [shape = 'u8[4096]{0}', space=vmem, size = 0x1000, scoped, tag = 'output window, operand 0, single buffered']
    %10 = vsyncpa [#allocation3], 0
    %11 = vsyncpa [#allocation6], 0
    %12 = vsyncpa [#allocation4], 0
    // Predicated region
    $region2: #{tpu_custom_call.1} parent=1 // pred_check
      _
    $region3: #{tpu_custom_call.1} parent=1 // pred_check_branch
      %14 = sbr.rel (0) target = $region5
    $region4: #{tpu_custom_call.1} parent=1 // pred_region
      %16 = vsyncadd [#allocation3], 0
      %s18 = sshll.u32 %s0, 4
      %s19 = int_to_ptr.hbm [resolvable:$true] %s18
      %s20 = sshll.u32 [#allocation2], 4
      %s21 = int_to_ptr.vmem [resolvable:$true] %s20
      %23 = dma.hbm_to_vmem [thread:$0]  %s19, 128, %s21, [#allocation3]
    $region5: #{tpu_custom_call.1} parent=1 // pred_fallthru
      _
    // Predicated region
    $region6: #{tpu_custom_call.1} parent=1 // pred_check
      _
    $region7: #{tpu_custom_call.1} parent=1 // pred_check_branch
      %25 = sbr.rel (0) target = $region9
    $region8: #{tpu_custom_call.1} parent=1 // pred_region
      %27 = vsyncadd [#allocation6], 0
      %s28 = sshll.u32 %s1, 4
      %s29 = int_to_ptr.hbm [resolvable:$true] %s28
      %s30 = sshll.u32 [#allocation5], 4
      %s31 = int_to_ptr.vmem [resolvable:$true] %s30
      %36 = dma.hbm_to_vmem [thread:$0]  %s29, 256, %s31, [#allocation6], 128, 128, 8
    $region9: #{tpu_custom_call.1} parent=1 // pred_fallthru
      _
    // Predicated region
    $region10: #{tpu_custom_call.1} parent=1 // pred_check
      _
    $region11: #{tpu_custom_call.1} parent=1 // pred_check_branch
      %38 = sbr.rel (0) target = $region13
    $region12: #{tpu_custom_call.1} parent=1 // pred_region
      _
    $region13: #{tpu_custom_call.1} parent=1 // pred_fallthru
      _
    // Predicated region
    $region14: #{tpu_custom_call.1} parent=1 // pred_check
      _
    $region15: #{tpu_custom_call.1} parent=1 // pred_check_branch
      %40 = sbr.rel (0) target = $region17
    $region16: #{tpu_custom_call.1} parent=1 // pred_region
      %42 = vsyncadd [#allocation6], 0
      %s43 = sshll.u32 %s3, 4
      %s44 = int_to_ptr.hbm [resolvable:$true] %s43
      %s45 = sshll.u32 [#allocation7], 4
      %s46 = int_to_ptr.vmem [resolvable:$true] %s45
      %51 = dma.hbm_to_vmem [thread:$0]  %s44, 512, %s46, [#allocation6], 128, 128, 8
    $region17: #{tpu_custom_call.1} parent=1 // pred_fallthru
      _
    // Predicated region
    $region18: #{tpu_custom_call.1} parent=1 // pred_check
      _
    $region19: #{tpu_custom_call.1} parent=1 // pred_check_branch
      %53 = sbr.rel (0) target = $region21
    $region20: #{tpu_custom_call.1} parent=1 // pred_region
      _
    $region21: #{tpu_custom_call.1} parent=1 // pred_fallthru
      _
    // Predicated region
    $region22: #{tpu_custom_call.1} parent=1 // pred_check
      _
    $region23: #{tpu_custom_call.1} parent=1 // pred_check_branch
      %55 = sbr.rel (0) target = $region25
    $region24: #{tpu_custom_call.1} parent=1 // pred_region
      %57 = dma.done [#allocation3], 128
    $region25: #{tpu_custom_call.1} parent=1 // pred_fallthru
      _
    // Predicated region
    $region26: #{tpu_custom_call.1} parent=1 // pred_check
      _
    $region27: #{tpu_custom_call.1} parent=1 // pred_check_branch
      %59 = sbr.rel (0) target = $region29
    $region28: #{tpu_custom_call.1} parent=1 // pred_region
      %61 = dma.done [#allocation6], 256
    $region29: #{tpu_custom_call.1} parent=1 // pred_fallthru
      _
    // Predicated region
    $region30: #{tpu_custom_call.1} parent=1 // pred_check
      _
    $region31: #{tpu_custom_call.1} parent=1 // pred_check_branch
      %63 = sbr.rel (0) target = $region33
    $region32: #{tpu_custom_call.1} parent=1 // pred_region
      %65 = dma.done [#allocation6], 512
    $region33: #{tpu_custom_call.1} parent=1 // pred_fallthru
      _
    %v66 = vld [vmem:[#allocation2] sm:$0xff]
    %v67 = vld [vmem:[#allocation5] sm:$0xff]
    %v68 = vld [vmem:[#allocation5 + $0x8] sm:$0xff]
    %v69 = vld [vmem:[%s2] sm:$0x1]
    %v71 = vperm.slane %v69, 0
    %vm73 = vcmask 130048
    %v75 = vsel %vm73, %v66, 0
    %77 = vmatpush.msra.mxu0 0.0
    %78 = vmatpush.msra.mxu0 0.0
    %79 = vmatpush.msra.mxu0 0.0
    %80 = vmatpush.msra.mxu0 0.0
    %81 = vmatpush.msra.mxu0 0.0
    %82 = vmatpush.msra.mxu0 0.0
    %83 = vmatpush.msra.mxu0 0.0
    %84 = vmatpush.msra.mxu0 0.0
    %85 = vmatpush.msra.mxu0 0.0
    %86 = vmatpush.msra.mxu0 0.0
    %87 = vmatpush.msra.mxu0 0.0
    %88 = vmatpush.msra.mxu0 0.0
    %89 = vmatpush.msra.mxu0 0.0
    %90 = vmatpush.msra.mxu0 0.0
    %91 = vmatpush.msra.mxu0 %v68
    %92 = vmatpush.msra.mxu0 %v67
    %93 = vmatmul.f32.gmra.mxu0 %v75
    %v94 = vpop.f32.mrf.mxu0
    %v95 = vadd.f32 %v71, %v94
    %96 = vdwg.mxu0
    %v97 = vmax.f32 %v95, 0.0
    %v98 = vld [vmem:[#allocation7] sm:$0xff]
    %v99 = vld [vmem:[#allocation7 + $0x8] sm:$0xff]
    %v100 = vld [vmem:[#allocation7 + $0x10] sm:$0xff]
    %v101 = vld [vmem:[#allocation7 + $0x18] sm:$0xff]
    %v102 = vld [vmem:[%s4] sm:$0x1]
    %v104 = vperm.slane %v102, 0
    %vm106 = vcmask 261120
    %v108 = vsel %vm106, %v97, 0
    %110 = vmatpush.msra.mxu0 0.0
    %111 = vmatpush.msra.mxu0 0.0
    %112 = vmatpush.msra.mxu0 0.0
    %113 = vmatpush.msra.mxu0 0.0
    %114 = vmatpush.msra.mxu0 0.0
    %115 = vmatpush.msra.mxu0 0.0
    %116 = vmatpush.msra.mxu0 0.0
    %117 = vmatpush.msra.mxu0 0.0
    %118 = vmatpush.msra.mxu0 0.0
    %119 = vmatpush.msra.mxu0 0.0
    %120 = vmatpush.msra.mxu0 0.0
    %121 = vmatpush.msra.mxu0 0.0
    %122 = vmatpush.msra.mxu0 %v101
    %123 = vmatpush.msra.mxu0 %v100
    %124 = vmatpush.msra.mxu0 %v99
    %125 = vmatpush.msra.mxu0 %v98
    %126 = vmatmul.f32.gmra.mxu0 %v108
    %v127 = vpop.f32.mrf.mxu0
    %v128 = vadd.f32 %v104, %v127
    %129 = vdwg.mxu0
    %v130 = vmul.f32 %v128, 0.5
    %v131 = vtanh.pop %v130
    %v132 = vmul.f32 %v131, 0.5
    %v133 = vadd.f32 %v132, 0.5
    %vm134 = vcmask 523264
    %135 = vst.msk [vmem:[#allocation8] sm:$0xff] %vm134, %v133
    // Predicated region
    $region34: #{tpu_custom_call.1} parent=1 // pred_check
      _
    $region35: #{tpu_custom_call.1} parent=1 // pred_check_branch
      %137 = sbr.rel (0) target = $region37
    $region36: #{tpu_custom_call.1} parent=1 // pred_region
      %139 = vsyncadd [#allocation4], 0
      %s141 = sshll.u32 [#allocation8], 4
      %s142 = int_to_ptr.vmem [resolvable:$true] %s141
      %s143 = sshll.u32 %s5, 4
      %s144 = int_to_ptr.hbm [resolvable:$true] %s143
      %146 = dma.vmem_to_hbm [thread:$0]  %s142, 128, %s144, [#allocation4]
    $region37: #{tpu_custom_call.1} parent=1 // pred_fallthru
      _
    // Predicated region
    $region38: #{tpu_custom_call.1} parent=1 // pred_check
      _
    $region39: #{tpu_custom_call.1} parent=1 // pred_check_branch
      %148 = sbr.rel (0) target = $region41
    $region40: #{tpu_custom_call.1} parent=1 // pred_region
      %150 = dma.done [#allocation4], 128
    $region41: #{tpu_custom_call.1} parent=1 // pred_fallthru
      _
    %151 = vsyncpa [#allocation3], 1
    %152 = vsyncpa [#allocation6], 1
    %153 = vsyncpa [#allocation4], 1

</llo_original>
